<compile_context>
chip_gen: v7x
topology: tpu7x:2x2x1
jax: 0.10.0
libtpu: 0.0.40
codegen_flags: <defaults>
</compile_context>

<pallas_src>
import functools

import jax
import jax.numpy as jnp
from jax import lax
from jax.experimental import pallas as pl
from jax.experimental.pallas import tpu as pltpu


def _round_up(x, m):
    return ((x + m - 1) // m) * m


def _vmem_capacity_bytes():
    """Per-TensorCore VMEM capacity; conservative (v7x) fallback if query fails."""
    try:
        cap = int(pltpu.get_tpu_info().vmem_capacity_bytes)
        if cap > 0:
            return cap
    except Exception:
        pass
    return 64 * 1024 * 1024


def _choose_tile_hw(C, HW, preds_bytes, target_bytes, vmem_cap, max_tile=65536):
    """Lane-dense HW tile sized against ~40% of VMEM, accounting for sublane padding of C."""
    c_pad = _round_up(max(C, 1), 8)
    # 2 pipeline buffers per input block + ~4 f32 temporaries (x, t, e, e*t) per lane.
    bytes_per_lane = c_pad * (2 * (preds_bytes + target_bytes) + 4 * 4)
    budget = (vmem_cap * 2) // 5
    tile = budget // bytes_per_lane
    tile = max(128, min(max_tile, (tile // 128) * 128))
    return min(tile, _round_up(HW, 128))


def _tversky_sums_kernel(preds_ref, target_ref, tp_ref, fn_ref, fp_ref, *,
                         hw, tile, tiles_per_split, approx_recip):
    """Processes one (C, tile) block of one batch element / HW split.

    Accumulates per (batch element, split):
      tp_ref (1,1): sum over valid columns of sum_c softmax(preds)[c] * target[c]
      fn_ref (1,1): sum(target) - tp      (per-tile difference, avoids cancellation)
      fp_ref (1,1): n_valid_columns - tp  (channel softmax sums to 1 per column)
    """
    p_idx = pl.program_id(1)
    t_idx = pl.program_id(2)

    # First HW tile of this (n, p) accumulator group -> reset.
    @pl.when(t_idx == 0)
    def _():
        tp_ref[...] = jnp.zeros_like(tp_ref)
        fn_ref[...] = jnp.zeros_like(fn_ref)
        fp_ref[...] = jnp.zeros_like(fp_ref)

    # Global column range covered by this tile (unclamped; overflow/ragged tail masked).
    hw_start = (p_idx * tiles_per_split + t_idx) * tile
    col = lax.broadcasted_iota(jnp.int32, (1, tile), 1)
    valid = (col + hw_start) < hw                              # (1, tile)

    x = preds_ref[...].astype(jnp.float32)                     # (C, tile)
    t = target_ref[...].astype(jnp.float32)                    # (C, tile)
    # Clamp preds in masked columns BEFORE exp (tail data is unspecified; could be
    # inf/NaN), and zero target there so masked columns contribute exactly nothing.
    x = jnp.where(valid, x, 0.0)
    t = jnp.where(valid, t, 0.0)

    # Numerically stable channel softmax (axis=0).  Only sum_c(softmax * t) is
    # needed, so reduce e*t over C first and pay one reciprocal+mul per column
    # instead of a divide per element.
    m = jnp.max(x, axis=0, keepdims=True)                      # (1, tile)
    e = jnp.exp(x - m)                                         # (C, tile)
    denom = jnp.sum(e, axis=0, keepdims=True)                  # (1, tile)
    num_t = jnp.sum(e * t, axis=0, keepdims=True)              # (1, tile)
    inv = pl.reciprocal(denom, approx=approx_recip)            # (1, tile)

    tp_tile = jnp.sum(num_t * inv, keepdims=True)              # (1, 1)
    st_tile = jnp.sum(t, keepdims=True)                        # (1, 1)
    n_valid = jnp.clip(hw - hw_start, 0, tile).astype(jnp.float32)

    tp_ref[...] += tp_tile
    fn_ref[...] += st_tile - tp_tile
    fp_ref[...] += n_valid - tp_tile


def tversky_loss(preds, target, alpha=0.3, beta=0.7, approx_recip=False,
                 target_dtype=None, tile=None):
    """preds, target: (N, C, H, W). Returns (tversky_index, tversky_loss) scalars."""
    N, C, H, W = preds.shape
    HW = H * W

    preds_f = preds.reshape(N, C, HW)
    target_f = target.reshape(N, C, HW)
    if target_dtype is not None:
        # Opt-in byte reduction (exact for binary / one-hot targets).
        target_f = target_f.astype(target_dtype)

    vmem_cap = _vmem_capacity_bytes()
    if tile is None:
        tile = _choose_tile_hw(C, HW, preds_f.dtype.itemsize,
                               target_f.dtype.itemsize, vmem_cap)
        if N == 1:
            # Ensure >= 2 HW tiles so the extra parallel split can feed both
            # TensorCores on v7x even at batch size 1.
            tile = min(tile, max(128, _round_up(pl.cdiv(HW, 2), 128)))

    num_hw_tiles = pl.cdiv(HW, tile)
    P = 2 if num_hw_tiles >= 2 else 1         # extra parallel HW split (v7x dual-TC)
    Tp = pl.cdiv(num_hw_tiles, P)

    grid = (N, P, Tp)
    kernel = functools.partial(_tversky_sums_kernel, hw=HW, tile=tile,
                               tiles_per_split=Tp, approx_recip=approx_recip)

    def in_map(n, p, t):
        # Clamp overflow tiles (when P does not divide num_hw_tiles) onto the last
        # valid block; their contribution is zeroed by the in-kernel column mask.
        return (n, 0, jnp.minimum(p * Tp + t, num_hw_tiles - 1))

    def out_spec():
        return pl.BlockSpec((pl.Squeezed(), pl.Squeezed(), 1, 1),
                            lambda n, p, t: (n, p, 0, 0))

    acc_shape = jax.ShapeDtypeStruct((N, P, 1, 1), jnp.float32)

    tp_parts, fn_parts, fp_parts = pl.pallas_call(
        kernel,
        out_shape=(acc_shape, acc_shape, acc_shape),
        grid=grid,
        in_specs=[
            pl.BlockSpec((pl.Squeezed(), C, tile), in_map),
            pl.BlockSpec((pl.Squeezed(), C, tile), in_map),
        ],
        out_specs=(out_spec(), out_spec(), out_spec()),
        compiler_params=pltpu.CompilerParams(
            dimension_semantics=("parallel", "parallel", "arbitrary"),
            vmem_limit_bytes=int(min(vmem_cap * 3 // 4, 96 * 1024 * 1024)),
        ),
    )(preds_f, target_f)

    tp = jnp.sum(tp_parts)
    fn = jnp.sum(fn_parts)
    fp = jnp.sum(fp_parts)

    smooth = 1.0
    tversky_index = tp / (tp + alpha * fn + beta * fp + smooth)
    return tversky_index, 1.0 - tversky_index


def _reference(preds, target, alpha=0.3, beta=0.7):
    """Pure-JAX reference mirroring the PyTorch module."""
    sm = jax.nn.softmax(preds, axis=1)  # F.softmax with no dim -> dim=1 for 4D
    b = preds.shape[0]
    p = sm.reshape(b, -1)
    t = target.reshape(b, -1)
    tp = jnp.sum(p * t)
    fn = jnp.sum((1 - p) * t)
    fp = jnp.sum((1 - t) * p)
    ti = tp / (tp + alpha * fn + beta * fp + 1.0)
    return ti, 1.0 - ti


def _check(preds, target, **kwargs):
    ti, tl = tversky_loss(preds, target, **kwargs)
    jax.block_until_ready((ti, tl))
    ti_ref, tl_ref = _reference(preds, target)
    assert jnp.allclose(ti, ti_ref, atol=1e-5, rtol=1e-5), (ti, ti_ref)
    assert jnp.allclose(tl, tl_ref, atol=1e-5, rtol=1e-5), (tl, tl_ref)


if __name__ == "__main__":
    key = jax.random.PRNGKey(0)
    k1, k2, k3, k4, k5, k6, k7, k8 = jax.random.split(key, 8)

    # Small NCHW case (HW multiple of 128 -> single full HW tile).
    N, C, H, W = 2, 4, 16, 16
    preds = jax.random.normal(k1, (N, C, H, W), dtype=jnp.float32)
    target = (jax.random.uniform(k2, (N, C, H, W)) > 0.5).astype(jnp.float32)
    _check(preds, target)

    # Ragged case: HW not a multiple of 128 -> exercises in-kernel tail masking
    # (no wrapper-side padding copies).
    preds2 = jax.random.normal(k3, (2, 3, 10, 10), dtype=jnp.float32)
    target2 = (jax.random.uniform(k4, (2, 3, 10, 10)) > 0.5).astype(jnp.float32)
    _check(preds2, target2)

    # Batch-1 case: exercises the extra parallel HW split (P=2) plus a ragged tail.
    preds3 = jax.random.normal(k5, (1, 3, 24, 24), dtype=jnp.float32)
    target3 = (jax.random.uniform(k6, (1, 3, 24, 24)) > 0.5).astype(jnp.float32)
    _check(preds3, target3)

    # Forced small tile with odd tile count: exercises the clamped overflow block
    # (duplicate tile fully masked) on the split p=1.
    preds4 = jax.random.normal(k7, (2, 4, 15, 20), dtype=jnp.float32)
    target4 = (jax.random.uniform(k8, (2, 4, 15, 20)) > 0.5).astype(jnp.float32)
    _check(preds4, target4, tile=128)

    print("KERNEL_OK")
</pallas_src>

<mosaic_0001>
module attributes {stable_mosaic.version = 11 : i64} {
  func.func @_tversky_sums_kernel(%arg0: i32, %arg1: i32, %arg2: i32, %arg3: memref<1x4x256xf32, #tpu.memory_space<vmem>>, %arg4: memref<1x4x256xf32, #tpu.memory_space<vmem>>, %arg5: memref<1x1x1x1xf32, #tpu.memory_space<vmem>>, %arg6: memref<1x1x1x1xf32, #tpu.memory_space<vmem>>, %arg7: memref<1x1x1x1xf32, #tpu.memory_space<vmem>>) attributes {dimension_semantics = [#tpu.dimension_semantics<parallel>, #tpu.dimension_semantics<parallel>, #tpu.dimension_semantics<arbitrary>], iteration_bounds = array<i64: 2, 1, 1>, scalar_prefetch = 0 : i64, scratch_operands = 0 : i64, tpu.core_type = #tpu.core_type<tc>, window_params = [{transform_indices = @transform_0, window_bounds = array<i64: 1, 4, 256>}, {transform_indices = @transform_1, window_bounds = array<i64: 1, 4, 256>}, {transform_indices = @transform_2, window_bounds = array<i64: 1, 1, 1, 1>}, {transform_indices = @transform_3, window_bounds = array<i64: 1, 1, 1, 1>}, {transform_indices = @transform_4, window_bounds = array<i64: 1, 1, 1, 1>}]} {
    %c0_i32 = arith.constant 0 : i32
    %0 = arith.cmpi eq, %arg2, %c0_i32 : i32
    %1 = arith.extui %0 : i1 to i32
    %c0_i32_0 = arith.constant 0 : i32
    %2 = arith.cmpi ne, %1, %c0_i32_0 : i32
    scf.if %2 {
      %cst_40 = arith.constant 0.000000e+00 : f32
      %70 = vector.broadcast %cst_40 : f32 to vector<1x1xf32>
      %c0_41 = arith.constant 0 : index
      %c0_42 = arith.constant 0 : index
      %c0_43 = arith.constant 0 : index
      %c0_44 = arith.constant 0 : index
      %71 = vector.load %arg5[%c0_41, %c0_42, %c0_43, %c0_44] : memref<1x1x1x1xf32, #tpu.memory_space<vmem>>, vector<1x1x1x1xf32>
      %72 = vector.shape_cast %71 : vector<1x1x1x1xf32> to vector<1x1xf32>
      %73 = vector.shape_cast %70 : vector<1x1xf32> to vector<1x1x1x1xf32>
      tpu.vector_store %arg5[%c0_41, %c0_42, %c0_43, %c0_44], %73 {strides = array<i32>} : memref<1x1x1x1xf32, #tpu.memory_space<vmem>>, vector<1x1x1x1xf32>,
      %cst_45 = arith.constant 0.000000e+00 : f32
      %74 = vector.broadcast %cst_45 : f32 to vector<1x1xf32>
      %c0_46 = arith.constant 0 : index
      %c0_47 = arith.constant 0 : index
      %c0_48 = arith.constant 0 : index
      %c0_49 = arith.constant 0 : index
      %75 = vector.load %arg6[%c0_46, %c0_47, %c0_48, %c0_49] : memref<1x1x1x1xf32, #tpu.memory_space<vmem>>, vector<1x1x1x1xf32>
      %76 = vector.shape_cast %75 : vector<1x1x1x1xf32> to vector<1x1xf32>
      %77 = vector.shape_cast %74 : vector<1x1xf32> to vector<1x1x1x1xf32>
      tpu.vector_store %arg6[%c0_46, %c0_47, %c0_48, %c0_49], %77 {strides = array<i32>} : memref<1x1x1x1xf32, #tpu.memory_space<vmem>>, vector<1x1x1x1xf32>,
      %cst_50 = arith.constant 0.000000e+00 : f32
      %78 = vector.broadcast %cst_50 : f32 to vector<1x1xf32>
      %c0_51 = arith.constant 0 : index
      %c0_52 = arith.constant 0 : index
      %c0_53 = arith.constant 0 : index
      %c0_54 = arith.constant 0 : index
      %79 = vector.load %arg7[%c0_51, %c0_52, %c0_53, %c0_54] : memref<1x1x1x1xf32, #tpu.memory_space<vmem>>, vector<1x1x1x1xf32>
      %80 = vector.shape_cast %79 : vector<1x1x1x1xf32> to vector<1x1xf32>
      %81 = vector.shape_cast %78 : vector<1x1xf32> to vector<1x1x1x1xf32>
      tpu.vector_store %arg7[%c0_51, %c0_52, %c0_53, %c0_54], %81 {strides = array<i32>} : memref<1x1x1x1xf32, #tpu.memory_space<vmem>>, vector<1x1x1x1xf32>,
    } else {
    }
    %c1_i32 = arith.constant 1 : i32
    %3 = arith.muli %arg1, %c1_i32 : i32
    %4 = arith.addi %3, %arg2 : i32
    %c256_i32 = arith.constant 256 : i32
    %5 = arith.muli %4, %c256_i32 : i32
    %6 = tpu.iota {dimensions = array<i32: 1>} : vector<1x256xi32>
    %7 = vector.broadcast %5 : i32 to vector<1x256xi32>
    %8 = arith.addi %6, %7 : vector<1x256xi32>
    %c256_i32_1 = arith.constant 256 : i32
    %9 = vector.broadcast %c256_i32_1 : i32 to vector<1x256xi32>
    %10 = arith.cmpi slt, %8, %9 : vector<1x256xi32>
    %c0 = arith.constant 0 : index
    %c0_2 = arith.constant 0 : index
    %c0_3 = arith.constant 0 : index
    %11 = vector.load %arg3[%c0, %c0_2, %c0_3] : memref<1x4x256xf32, #tpu.memory_space<vmem>>, vector<1x4x256xf32>
    %12 = vector.shape_cast %11 : vector<1x4x256xf32> to vector<4x256xf32>
    %c0_4 = arith.constant 0 : index
    %c0_5 = arith.constant 0 : index
    %c0_6 = arith.constant 0 : index
    %13 = vector.load %arg4[%c0_4, %c0_5, %c0_6] : memref<1x4x256xf32, #tpu.memory_space<vmem>>, vector<1x4x256xf32>
    %14 = vector.shape_cast %13 : vector<1x4x256xf32> to vector<4x256xf32>
    %cst = arith.constant 0.000000e+00 : f32
    %15 = vector.shape_cast %10 : vector<1x256xi1> to vector<1x256xi1>
    %16 = vector.broadcast %15 : vector<1x256xi1> to vector<4x256xi1>
    %17 = vector.broadcast %cst : f32 to vector<4x256xf32>
    %18 = arith.select %16, %12, %17 : vector<4x256xi1>, vector<4x256xf32>
    %cst_7 = arith.constant 0.000000e+00 : f32
    %19 = vector.shape_cast %10 : vector<1x256xi1> to vector<1x256xi1>
    %20 = vector.broadcast %19 : vector<1x256xi1> to vector<4x256xi1>
    %21 = vector.broadcast %cst_7 : f32 to vector<4x256xf32>
    %22 = arith.select %20, %14, %21 : vector<4x256xi1>, vector<4x256xf32>
    %cst_8 = arith.constant dense<0xFF800000> : vector<256xf32>
    %23 = vector.multi_reduction <maximumf>, %18, %cst_8 [0] : vector<4x256xf32> to vector<256xf32>
    %24 = vector.shape_cast %23 : vector<256xf32> to vector<1x256xf32>
    %25 = vector.broadcast %24 : vector<1x256xf32> to vector<4x256xf32>
    %26 = arith.subf %18, %25 : vector<4x256xf32>
    %27 = math.exp %26 : vector<4x256xf32>
    %cst_9 = arith.constant dense<0.000000e+00> : vector<256xf32>
    %28 = vector.multi_reduction <add>, %27, %cst_9 [0] : vector<4x256xf32> to vector<256xf32>
    %29 = vector.shape_cast %28 : vector<256xf32> to vector<1x256xf32>
    %30 = arith.mulf %27, %22 : vector<4x256xf32>
    %cst_10 = arith.constant dense<0.000000e+00> : vector<256xf32>
    %31 = vector.multi_reduction <add>, %30, %cst_10 [0] : vector<4x256xf32> to vector<256xf32>
    %32 = vector.shape_cast %31 : vector<256xf32> to vector<1x256xf32>
    %33 = tpu.reciprocal %29 : vector<1x256xf32> -> vector<1x256xf32>
    %34 = arith.mulf %32, %33 : vector<1x256xf32>
    %35 = vector.shape_cast %34 : vector<1x256xf32> to vector<1x1x256xf32>
    %cst_11 = arith.constant dense<0.000000e+00> : vector<1xf32>
    %36 = vector.multi_reduction <add>, %35, %cst_11 [1, 2] : vector<1x1x256xf32> to vector<1xf32>
    %37 = vector.shape_cast %36 : vector<1xf32> to vector<1x1x1xf32>
    %38 = vector.extract %37[0, 0, 0] : f32 from vector<1x1x1xf32>
    %39 = vector.broadcast %38 : f32 to vector<1x1xf32>
    %40 = vector.shape_cast %22 : vector<4x256xf32> to vector<1x4x256xf32>
    %cst_12 = arith.constant dense<0.000000e+00> : vector<1xf32>
    %41 = vector.multi_reduction <add>, %40, %cst_12 [1, 2] : vector<1x4x256xf32> to vector<1xf32>
    %42 = vector.shape_cast %41 : vector<1xf32> to vector<1x1x1xf32>
    %43 = vector.extract %42[0, 0, 0] : f32 from vector<1x1x1xf32>
    %44 = vector.broadcast %43 : f32 to vector<1x1xf32>
    %c256_i32_13 = arith.constant 256 : i32
    %45 = arith.subi %c256_i32_13, %5 : i32
    %c0_i32_14 = arith.constant 0 : i32
    %c256_i32_15 = arith.constant 256 : i32
    %46 = arith.maxsi %c0_i32_14, %45 : i32
    %47 = arith.minsi %c256_i32_15, %46 : i32
    %48 = arith.sitofp %47 : i32 to f32
    %c0_16 = arith.constant 0 : index
    %c0_17 = arith.constant 0 : index
    %c0_18 = arith.constant 0 : index
    %c0_19 = arith.constant 0 : index
    %49 = vector.load %arg5[%c0_16, %c0_17, %c0_18, %c0_19] : memref<1x1x1x1xf32, #tpu.memory_space<vmem>>, vector<1x1x1x1xf32>
    %50 = vector.shape_cast %49 : vector<1x1x1x1xf32> to vector<1x1xf32>
    %51 = arith.addf %50, %39 : vector<1x1xf32>
    %c0_20 = arith.constant 0 : index
    %c0_21 = arith.constant 0 : index
    %c0_22 = arith.constant 0 : index
    %c0_23 = arith.constant 0 : index
    %52 = vector.load %arg5[%c0_20, %c0_21, %c0_22, %c0_23] : memref<1x1x1x1xf32, #tpu.memory_space<vmem>>, vector<1x1x1x1xf32>
    %53 = vector.shape_cast %52 : vector<1x1x1x1xf32> to vector<1x1xf32>
    %54 = vector.shape_cast %51 : vector<1x1xf32> to vector<1x1x1x1xf32>
    tpu.vector_store %arg5[%c0_20, %c0_21, %c0_22, %c0_23], %54 {strides = array<i32>} : memref<1x1x1x1xf32, #tpu.memory_space<vmem>>, vector<1x1x1x1xf32>,
    %c0_24 = arith.constant 0 : index
    %c0_25 = arith.constant 0 : index
    %c0_26 = arith.constant 0 : index
    %c0_27 = arith.constant 0 : index
    %55 = vector.load %arg6[%c0_24, %c0_25, %c0_26, %c0_27] : memref<1x1x1x1xf32, #tpu.memory_space<vmem>>, vector<1x1x1x1xf32>
    %56 = vector.shape_cast %55 : vector<1x1x1x1xf32> to vector<1x1xf32>
    %57 = arith.subf %44, %39 : vector<1x1xf32>
    %58 = arith.addf %56, %57 : vector<1x1xf32>
    %c0_28 = arith.constant 0 : index
    %c0_29 = arith.constant 0 : index
    %c0_30 = arith.constant 0 : index
    %c0_31 = arith.constant 0 : index
    %59 = vector.load %arg6[%c0_28, %c0_29, %c0_30, %c0_31] : memref<1x1x1x1xf32, #tpu.memory_space<vmem>>, vector<1x1x1x1xf32>
    %60 = vector.shape_cast %59 : vector<1x1x1x1xf32> to vector<1x1xf32>
    %61 = vector.shape_cast %58 : vector<1x1xf32> to vector<1x1x1x1xf32>
    tpu.vector_store %arg6[%c0_28, %c0_29, %c0_30, %c0_31], %61 {strides = array<i32>} : memref<1x1x1x1xf32, #tpu.memory_space<vmem>>, vector<1x1x1x1xf32>,
    %c0_32 = arith.constant 0 : index
    %c0_33 = arith.constant 0 : index
    %c0_34 = arith.constant 0 : index
    %c0_35 = arith.constant 0 : index
    %62 = vector.load %arg7[%c0_32, %c0_33, %c0_34, %c0_35] : memref<1x1x1x1xf32, #tpu.memory_space<vmem>>, vector<1x1x1x1xf32>
    %63 = vector.shape_cast %62 : vector<1x1x1x1xf32> to vector<1x1xf32>
    %64 = vector.broadcast %48 : f32 to vector<1x1xf32>
    %65 = arith.subf %64, %39 : vector<1x1xf32>
    %66 = arith.addf %63, %65 : vector<1x1xf32>
    %c0_36 = arith.constant 0 : index
    %c0_37 = arith.constant 0 : index
    %c0_38 = arith.constant 0 : index
    %c0_39 = arith.constant 0 : index
    %67 = vector.load %arg7[%c0_36, %c0_37, %c0_38, %c0_39] : memref<1x1x1x1xf32, #tpu.memory_space<vmem>>, vector<1x1x1x1xf32>
    %68 = vector.shape_cast %67 : vector<1x1x1x1xf32> to vector<1x1xf32>
    %69 = vector.shape_cast %66 : vector<1x1xf32> to vector<1x1x1x1xf32>
    tpu.vector_store %arg7[%c0_36, %c0_37, %c0_38, %c0_39], %69 {strides = array<i32>} : memref<1x1x1x1xf32, #tpu.memory_space<vmem>>, vector<1x1x1x1xf32>,
    return
  }
  func.func @transform_0(%arg0: i32, %arg1: i32, %arg2: i32) -> (i32, i32, i32) {
    %c1_i32 = arith.constant 1 : i32
    %0 = arith.muli %arg1, %c1_i32 : i32
    %1 = arith.addi %0, %arg2 : i32
    %c0_i32 = arith.constant 0 : i32
    %2 = arith.minsi %1, %c0_i32 : i32
    %c0_i32_0 = arith.constant 0 : i32
    %c0_i32_1 = arith.constant 0 : i32
    return %arg0, %c0_i32_0, %2 : i32, i32, i32
  }
  func.func @transform_1(%arg0: i32, %arg1: i32, %arg2: i32) -> (i32, i32, i32) {
    %c1_i32 = arith.constant 1 : i32
    %0 = arith.muli %arg1, %c1_i32 : i32
    %1 = arith.addi %0, %arg2 : i32
    %c0_i32 = arith.constant 0 : i32
    %2 = arith.minsi %1, %c0_i32 : i32
    %c0_i32_0 = arith.constant 0 : i32
    %c0_i32_1 = arith.constant 0 : i32
    return %arg0, %c0_i32_0, %2 : i32, i32, i32
  }
  func.func @transform_2(%arg0: i32, %arg1: i32, %arg2: i32) -> (i32, i32, i32, i32) {
    %c0_i32 = arith.constant 0 : i32
    %c0_i32_0 = arith.constant 0 : i32
    %c0_i32_1 = arith.constant 0 : i32
    return %arg0, %arg1, %c0_i32, %c0_i32_0 : i32, i32, i32, i32
  }
  func.func @transform_3(%arg0: i32, %arg1: i32, %arg2: i32) -> (i32, i32, i32, i32) {
    %c0_i32 = arith.constant 0 : i32
    %c0_i32_0 = arith.constant 0 : i32
    %c0_i32_1 = arith.constant 0 : i32
    return %arg0, %arg1, %c0_i32, %c0_i32_0 : i32, i32, i32, i32
  }
  func.func @transform_4(%arg0: i32, %arg1: i32, %arg2: i32) -> (i32, i32, i32, i32) {
    %c0_i32 = arith.constant 0 : i32
    %c0_i32_0 = arith.constant 0 : i32
    %c0_i32_1 = arith.constant 0 : i32
    return %arg0, %arg1, %c0_i32, %c0_i32_0 : i32, i32, i32, i32
  }
}

</mosaic_0001>

<llo_original>
// kernel: tpu_custom_call.1
$region0: #{tpu_custom_call.1}
  #allocation0 [shape = 'u32[]', space=smem, size = 0x4, offset = 0x4, fixed_abs, tag = 'smem constant byte address 0x4 - core index']
  #allocation1 [shape = 'u32[144,128]{1,0:T(1,128)}', space=vmem, size = 0x12000, scoped, tag = 'internal scratch']
  %s0 = inlined_call_operand.hbm [shape: f32[2,4,256], index: 0, kind: input, shape index: {}]
  %s1 = inlined_call_operand.hbm [shape: f32[2,4,256], index: 1, kind: input, shape index: {}]
  %s2 = inlined_call_operand.vmem [shape: f32[2,1,1,1], index: 2, kind: output, shape index: {0}]
  %s3 = inlined_call_operand.vmem [shape: f32[2,1,1,1], index: 3, kind: output, shape index: {1}]
  %s4 = inlined_call_operand.vmem [shape: f32[2,1,1,1], index: 4, kind: output, shape index: {2}]
  %5 = xla_tuple %s2, %s3, %s4
  %s6 = sld [smem:[#allocation0]]
  $region69: #{tpu_custom_call.1} parent=0
    _
  %s8 = ssub.s32 1, %s6
  %s9 = scalar_select 0, %s8, %s6
  $region1: #{tpu_custom_call.1} parent=0
    #allocation2 [shape = 'u8[8192]{0}', space=vmem, size = 0x2000, scoped, tag = 'input window, operand 0']
    #allocation3 [shape = 's32[2]{0}', space=sflag, size = 0x8, scoped, tag = 'scoped memory for tpu_custom_call.1']
    #allocation4 [shape = 'u8[8192]{0}', space=vmem, size = 0x2000, scoped, tag = 'input window, operand 1']
    #allocation5 [shape = 's32[2]{0}', space=sflag, size = 0x8, scoped, tag = 'scoped memory for tpu_custom_call.1']
    %10 = vsyncpa [#allocation3], 0
    %s11 = scalar_lea.sflag [#allocation3], 1
    %12 = vsyncpa %s11, 0
    %13 = vsyncpa [#allocation5], 0
    %s14 = scalar_lea.sflag [#allocation5], 1
    %15 = vsyncpa %s14, 0
    loop: start=0, step=1, limit=4
    $region2: #{tpu_custom_call.1} parent=1 // loop_pre_header
      _
    $region3: #{tpu_custom_call.1} parent=1 // loop_header
      %s17 = sphi 0, %s21
      %p18 = scmp.ge.s32.totalorder %s17, 4
      %s24 = sphi 0, %s43
      %s25 = sphi 0, %s39
      %s26 = sphi 0, %s35
      %s27 = sphi 0, %s24
      %s28 = sphi 0, %s25
      %s29 = sphi 0, %s26
      %s30 = sphi 0, %s27
      %s31 = sphi 0, %s28
      %s32 = sphi 0, %s29
      %s54 = sphi 0, %s56
      %s57 = sphi 0, %s54
      %s58 = sphi 0, %s57
      %s74 = sphi 0, %s58
      %s88 = sphi 0, %s90
      %s91 = sphi 0, %s88
      %s92 = sphi 0, %s91
      %s108 = sphi 0, %s92
      %s116 = sphi 0, %s118
      %s119 = sphi 0, %s116
      %s120 = sphi 0, %s119
      %s136 = sphi 0, %s120
      %s144 = sphi 0, %s146
      %s147 = sphi 0, %s144
      %s148 = sphi 0, %s147
      %s164 = sphi 0, %s148
      %s172 = sphi 0, %s174
      %s175 = sphi 0, %s172
      %s176 = sphi 0, %s175
      %s192 = sphi 0, %s176
    $region4: #{tpu_custom_call.1} parent=1 // loop_header_branch
      %20 = sbr.rel (%p18) target = $region8
    $region5: #{tpu_custom_call.1} parent=1 // loop_body
      %s22 = ssub.s32 %s17, 1
      %s23 = ssub.s32 %s17, 2
      %s33 = sadd.s32 1, %s26
      %p34 = scmp.ge.s32.totalorder %s33, 1
      %s35 = scalar_select %p34, 0, %s33
      %s36 = sadd.s32 1, %s25
      %s37 = scalar_select %p34, %s36, %s25
      %p38 = scmp.ge.s32.totalorder %s37, 1
      %s39 = scalar_select %p38, 0, %s37
      %s40 = sadd.s32 1, %s24
      %s41 = scalar_select %p38, %s40, %s24
      %p42 = scmp.ge.s32.totalorder %s41, 2
      %s43 = scalar_select %p42, 0, %s41
      %s44 = sadd.s32 %s25, %s26
      %p45 = scmp.lt.s32.totalorder %s44, 0
      %s46 = scalar_select %p45, %s44, 0
      %s47 = sadd.s32 %s39, %s35
      %p48 = scmp.lt.s32.totalorder %s47, 0
      %s49 = scalar_select %p48, %s47, 0
      %s50 = ssub.s32 %s24, %s43
      %s51 = ssub.s32 %s46, %s49
      %s52 = sor.u32 %s50, %s51
      %p53 = scmp.eq.s32.totalorder %s52, 0
      %s55 = sadd.s32 %s54, 1
      %s56 = scalar_select %p53, %s54, %s55
      %p59 = pneg %p53
      %p60 = scmp.eq.s32.totalorder %s17, 1
      %p61 = por %p59, %p60
      %p62 = scmp.ne.s32.totalorder %s54, %s57
      %p63 = scmp.eq.s32.totalorder %s17, 0
      %p64 = por %p62, %p63
      %p65 = scmp.ne.s32.totalorder %s54, %s57
      %p66 = scmp.eq.s32.totalorder %s22, 1
      %p67 = por %p65, %p66
      %p68 = scmp.ne.s32.totalorder %s57, %s58
      %p69 = scmp.eq.s32.totalorder %s22, 0
      %p70 = por %p68, %p69
      %p71 = scmp.ne.s32.totalorder %s57, %s58
      %p72 = scmp.eq.s32.totalorder %s23, 1
      %p73 = por %p71, %p72
      %p75 = scmp.ne.s32.totalorder %s58, %s74
      %p76 = scmp.eq.s32.totalorder %s23, 0
      %p77 = por %p75, %p76
      %s78 = sadd.s32 %s25, %s26
      %p79 = scmp.lt.s32.totalorder %s78, 0
      %s80 = scalar_select %p79, %s78, 0
      %s81 = sadd.s32 %s39, %s35
      %p82 = scmp.lt.s32.totalorder %s81, 0
      %s83 = scalar_select %p82, %s81, 0
      %s84 = ssub.s32 %s24, %s43
      %s85 = ssub.s32 %s80, %s83
      %s86 = sor.u32 %s84, %s85
      %p87 = scmp.eq.s32.totalorder %s86, 0
      %s89 = sadd.s32 %s88, 1
      %s90 = scalar_select %p87, %s88, %s89
      %p93 = pneg %p87
      %p94 = scmp.eq.s32.totalorder %s17, 1
      %p95 = por %p93, %p94
      %p96 = scmp.ne.s32.totalorder %s88, %s91
      %p97 = scmp.eq.s32.totalorder %s17, 0
      %p98 = por %p96, %p97
      %p99 = scmp.ne.s32.totalorder %s88, %s91
      %p100 = scmp.eq.s32.totalorder %s22, 1
      %p101 = por %p99, %p100
      %p102 = scmp.ne.s32.totalorder %s91, %s92
      %p103 = scmp.eq.s32.totalorder %s22, 0
      %p104 = por %p102, %p103
      %p105 = scmp.ne.s32.totalorder %s91, %s92
      %p106 = scmp.eq.s32.totalorder %s23, 1
      %p107 = por %p105, %p106
      %p109 = scmp.ne.s32.totalorder %s92, %s108
      %p110 = scmp.eq.s32.totalorder %s23, 0
      %p111 = por %p109, %p110
      %s112 = ssub.s32 %s24, %s43
      %s113 = ssub.s32 %s25, %s39
      %s114 = sor.u32 %s112, %s113
      %p115 = scmp.eq.s32.totalorder %s114, 0
      %s117 = sadd.s32 %s116, 1
      %s118 = scalar_select %p115, %s116, %s117
      %p121 = pneg %p115
      %p122 = scmp.eq.s32.totalorder %s17, 1
      %p123 = por %p121, %p122
      %p124 = scmp.ne.s32.totalorder %s116, %s119
      %p125 = scmp.eq.s32.totalorder %s17, 0
      %p126 = por %p124, %p125
      %p127 = scmp.ne.s32.totalorder %s116, %s119
      %p128 = scmp.eq.s32.totalorder %s22, 1
      %p129 = por %p127, %p128
      %p130 = scmp.ne.s32.totalorder %s119, %s120
      %p131 = scmp.eq.s32.totalorder %s22, 0
      %p132 = por %p130, %p131
      %p133 = scmp.ne.s32.totalorder %s119, %s120
      %p134 = scmp.eq.s32.totalorder %s23, 1
      %p135 = por %p133, %p134
      %p137 = scmp.ne.s32.totalorder %s120, %s136
      %p138 = scmp.eq.s32.totalorder %s23, 0
      %p139 = por %p137, %p138
      %s140 = ssub.s32 %s24, %s43
      %s141 = ssub.s32 %s25, %s39
      %s142 = sor.u32 %s140, %s141
      %p143 = scmp.eq.s32.totalorder %s142, 0
      %s145 = sadd.s32 %s144, 1
      %s146 = scalar_select %p143, %s144, %s145
      %p149 = pneg %p143
      %p150 = scmp.eq.s32.totalorder %s17, 1
      %p151 = por %p149, %p150
      %p152 = scmp.ne.s32.totalorder %s144, %s147
      %p153 = scmp.eq.s32.totalorder %s17, 0
      %p154 = por %p152, %p153
      %p155 = scmp.ne.s32.totalorder %s144, %s147
      %p156 = scmp.eq.s32.totalorder %s22, 1
      %p157 = por %p155, %p156
      %p158 = scmp.ne.s32.totalorder %s147, %s148
      %p159 = scmp.eq.s32.totalorder %s22, 0
      %p160 = por %p158, %p159
      %p161 = scmp.ne.s32.totalorder %s147, %s148
      %p162 = scmp.eq.s32.totalorder %s23, 1
      %p163 = por %p161, %p162
      %p165 = scmp.ne.s32.totalorder %s148, %s164
      %p166 = scmp.eq.s32.totalorder %s23, 0
      %p167 = por %p165, %p166
      %s168 = ssub.s32 %s24, %s43
      %s169 = ssub.s32 %s25, %s39
      %s170 = sor.u32 %s168, %s169
      %p171 = scmp.eq.s32.totalorder %s170, 0
      %s173 = sadd.s32 %s172, 1
      %s174 = scalar_select %p171, %s172, %s173
      %p177 = pneg %p171
      %p178 = scmp.eq.s32.totalorder %s17, 1
      %p179 = por %p177, %p178
      %p180 = scmp.ne.s32.totalorder %s172, %s175
      %p181 = scmp.eq.s32.totalorder %s17, 0
      %p182 = por %p180, %p181
      %p183 = scmp.ne.s32.totalorder %s172, %s175
      %p184 = scmp.eq.s32.totalorder %s22, 1
      %p185 = por %p183, %p184
      %p186 = scmp.ne.s32.totalorder %s175, %s176
      %p187 = scmp.eq.s32.totalorder %s22, 0
      %p188 = por %p186, %p187
      %p189 = scmp.ne.s32.totalorder %s175, %s176
      %p190 = scmp.eq.s32.totalorder %s23, 1
      %p191 = por %p189, %p190
      %p193 = scmp.ne.s32.totalorder %s176, %s192
      %p194 = scmp.eq.s32.totalorder %s23, 0
      %p195 = por %p193, %p194
      %p196 = scmp.le.s32.totalorder 1, %s17
      %p197 = scmp.lt.s32.totalorder %s17, 3
      %p198 = pnand %p196, %p197
      %p199 = pneg %p198
      // Predicated region
      $region9: #{tpu_custom_call.1} parent=5 // pred_check
        _
      $region10: #{tpu_custom_call.1} parent=5 // pred_check_branch
        %201 = sbr.rel (%p198) target = $region12
      $region11: #{tpu_custom_call.1} parent=5 // pred_region
        %s202 = ssub.s32 %s17, 1
      $region12: #{tpu_custom_call.1} parent=5 // pred_fallthru
        _
      %p203 = scmp.lt.s32.totalorder %s17, 2
      // Predicated region
      $region13: #{tpu_custom_call.1} parent=5 // pred_check
        %p204 = pneg %p203
      $region14: #{tpu_custom_call.1} parent=5 // pred_check_branch
        %206 = sbr.rel (%p204) target = $region16
      $region15: #{tpu_custom_call.1} parent=5 // pred_region
        // Predicated region
        $region17: #{tpu_custom_call.1} parent=15 // pred_check
          %p207 = pneg %p64
        $region18: #{tpu_custom_call.1} parent=15 // pred_check_branch
          %209 = sbr.rel (%p207) target = $region20
        $region19: #{tpu_custom_call.1} parent=15 // pred_region
          %s210 = sand.u32 %s54, 1
          %s211 = scalar_lea.sflag [#allocation3], %s210
          %s212 = sand.u32 %s54, 1
          %s213 = smul.addr %s212, 8
          %s214 = scalar_lea.vmem [#allocation2], %s213
          %s215 = sadd.s32 %s25, %s26
          %p216 = scmp.lt.s32.totalorder %s215, 0
          %s217 = scalar_select %p216, %s215, 0
          %s218 = smul.u32 2, %s217
          %s220 = ssub.s32 128, 128
          %221 = vsyncadd %s211, %s220
          %s222 = smul.addr %s24, 2
          %s223 = sadd.s32 %s218, %s222
          %s224 = smul.addr %s223, 64
          %s225 = scalar_lea.hbm %s0, %s224
          %s227 = sshll.u32 %s214, 4
          %s228 = int_to_ptr.vmem [resolvable:$true] %s227
          %230 = dma.hbm_to_vmem [thread:$0]  %s225, 128, %s228, %s211
        $region20: #{tpu_custom_call.1} parent=15 // pred_fallthru
          _
        // Predicated region
        $region21: #{tpu_custom_call.1} parent=15 // pred_check
          %p231 = pneg %p98
        $region22: #{tpu_custom_call.1} parent=15 // pred_check_branch
          %233 = sbr.rel (%p231) target = $region24
        $region23: #{tpu_custom_call.1} parent=15 // pred_region
          %s234 = sand.u32 %s88, 1
          %s235 = scalar_lea.sflag [#allocation5], %s234
          %s236 = sand.u32 %s88, 1
          %s237 = smul.addr %s236, 8
          %s238 = scalar_lea.vmem [#allocation4], %s237
          %s239 = sadd.s32 %s25, %s26
          %p240 = scmp.lt.s32.totalorder %s239, 0
          %s241 = scalar_select %p240, %s239, 0
          %s242 = smul.u32 2, %s241
          %s244 = ssub.s32 128, 128
          %245 = vsyncadd %s235, %s244
          %s246 = smul.addr %s24, 2
          %s247 = sadd.s32 %s242, %s246
          %s248 = smul.addr %s247, 64
          %s249 = scalar_lea.hbm %s1, %s248
          %s251 = sshll.u32 %s238, 4
          %s252 = int_to_ptr.vmem [resolvable:$true] %s251
          %254 = dma.hbm_to_vmem [thread:$0]  %s249, 128, %s252, %s235
        $region24: #{tpu_custom_call.1} parent=15 // pred_fallthru
          _
      $region16: #{tpu_custom_call.1} parent=5 // pred_fallthru
        _
      %p255 = scmp.le.s32.totalorder 1, %s17
      %p256 = scmp.lt.s32.totalorder %s17, 3
      %p257 = pnand %p255, %p256
      %p258 = pneg %p257
      // Predicated region
      $region25: #{tpu_custom_call.1} parent=5 // pred_check
        _
      $region26: #{tpu_custom_call.1} parent=5 // pred_check_branch
        %260 = sbr.rel (%p257) target = $region28
      $region27: #{tpu_custom_call.1} parent=5 // pred_region
        %s261 = ssub.s32 %s17, 1
        %s262 = sand.u32 %s57, 1
        %s263 = scalar_lea.sflag [#allocation3], %s262
        %s264 = sand.u32 %s57, 1
        %s265 = smul.addr %s264, 8
        %s266 = scalar_lea.vmem [#allocation2], %s265
        // Predicated region
        $region29: #{tpu_custom_call.1} parent=27 // pred_check
          %p267 = pneg %p70
        $region30: #{tpu_custom_call.1} parent=27 // pred_check_branch
          %269 = sbr.rel (%p267) target = $region32
        $region31: #{tpu_custom_call.1} parent=27 // pred_region
          %270 = dma.done %s263, 128
        $region32: #{tpu_custom_call.1} parent=27 // pred_fallthru
          _
        %s271 = sand.u32 %s91, 1
        %s272 = scalar_lea.sflag [#allocation5], %s271
        %s273 = sand.u32 %s91, 1
        %s274 = smul.addr %s273, 8
        %s275 = scalar_lea.vmem [#allocation4], %s274
        // Predicated region
        $region33: #{tpu_custom_call.1} parent=27 // pred_check
          %p276 = pneg %p104
        $region34: #{tpu_custom_call.1} parent=27 // pred_check_branch
          %278 = sbr.rel (%p276) target = $region36
        $region35: #{tpu_custom_call.1} parent=27 // pred_region
          %279 = dma.done %s272, 128
        $region36: #{tpu_custom_call.1} parent=27 // pred_fallthru
          _
        %s280 = sand.u32 %s57, 1
        %s281 = scalar_lea.sflag [#allocation3], %s280
        %s282 = sand.u32 %s57, 1
        %s283 = smul.addr %s282, 8
        %s284 = scalar_lea.vmem [#allocation2], %s283
        %p285 = pneg %p70
        %p286 = pneg %p67
        %s287 = sand.u32 %s91, 1
        %s288 = scalar_lea.sflag [#allocation5], %s287
        %s289 = sand.u32 %s91, 1
        %s290 = smul.addr %s289, 8
        %s291 = scalar_lea.vmem [#allocation4], %s290
        %p292 = pneg %p104
        %p293 = pneg %p101
        %p294 = pneg %p132
        %p295 = pneg %p129
        %p296 = scmp.lt.s32.totalorder %s27, 1
        %s297 = scalar_select %p296, %s27, 1
        %p298 = scmp.lt.s32.totalorder %s28, 0
        %s299 = scalar_select %p298, %s28, 0
        %s300 = sadd.s32 %s299, %s297
        %s301 = scalar_lea.vmem %s2, %s300
        %p302 = pneg %p160
        %p303 = pneg %p157
        %p304 = scmp.lt.s32.totalorder %s27, 1
        %s305 = scalar_select %p304, %s27, 1
        %p306 = scmp.lt.s32.totalorder %s28, 0
        %s307 = scalar_select %p306, %s28, 0
        %s308 = sadd.s32 %s307, %s305
        %s309 = scalar_lea.vmem %s3, %s308
        %p310 = pneg %p188
        %p311 = pneg %p185
        %p312 = scmp.lt.s32.totalorder %s27, 1
        %s313 = scalar_select %p312, %s27, 1
        %p314 = scmp.lt.s32.totalorder %s28, 0
        %s315 = scalar_select %p314, %s28, 0
        %s316 = sadd.s32 %s315, %s313
        %s317 = scalar_lea.vmem %s4, %s316
        %s318 = sadd.s32 %s28, %s29
        %p319 = scmp.lt.s32.totalorder %s318, 0
        %s320 = scalar_select %p319, %s318, 0
        %s321 = smul.u32 2, %s320
        %s322 = sadd.s32 %s28, %s29
        %p323 = scmp.lt.s32.totalorder %s322, 0
        %s324 = scalar_select %p323, %s322, 0
        %s325 = smul.u32 2, %s324
        %p326 = scmp.lt.s32.totalorder %s27, 1
        %s327 = scalar_select %p326, %s27, 1
        %p328 = scmp.lt.s32.totalorder %s28, 0
        %s329 = scalar_select %p328, %s28, 0
        %s330 = sadd.s32 %s329, %s327
        %s331 = scalar_lea.vmem %s2, %s330
        %p332 = scmp.lt.s32.totalorder %s27, 1
        %s333 = scalar_select %p332, %s27, 1
        %p334 = scmp.lt.s32.totalorder %s28, 0
        %s335 = scalar_select %p334, %s28, 0
        %s336 = sadd.s32 %s335, %s333
        %s337 = scalar_lea.vmem %s3, %s336
        %p338 = scmp.lt.s32.totalorder %s27, 1
        %s339 = scalar_select %p338, %s27, 1
        %p340 = scmp.lt.s32.totalorder %s28, 0
        %s341 = scalar_select %p340, %s28, 0
        %s342 = sadd.s32 %s341, %s339
        %s343 = scalar_lea.vmem %s4, %s342
        %p344 = scmp.eq.s32.totalorder %s29, 0
        // Predicated region
        $region37: #{tpu_custom_call.1} parent=27 // pred_check
          %p345 = pneg %p344
        $region38: #{tpu_custom_call.1} parent=27 // pred_check_branch
          %347 = sbr.rel (%p345) target = $region40
        $region39: #{tpu_custom_call.1} parent=27 // pred_region
          %vm348 = vcmask 0
          %349 = vst.msk [vmem:[%s331] sm:$0x1] %vm348, 0.0
          %350 = vst.msk [vmem:[%s337] sm:$0x1] %vm348, 0.0
          %351 = vst.msk [vmem:[%s343] sm:$0x1] %vm348, 0.0
        $region40: #{tpu_custom_call.1} parent=27 // pred_fallthru
          _
        %s352 = sadd.s32 %s28, %s29
        %s353 = smul.u32 %s352, 256
        %v354 = vlaneseq
        %v355 = vand.u32 %v354, 127
        %v356 = vadd.s32 %v355, 128
        %v357 = vstv %s353
        %v358 = vadd.s32 %v355, %v357
        %v359 = vadd.s32 %v356, %v357
        %vm360 = vcmp.lt.s32.totalorder %v358, 256
        %vm361 = vcmp.lt.s32.totalorder %v359, 256
        %v362 = vld [vmem:[%s266] sm:$0xff]
        %v363 = vld [vmem:[%s275] sm:$0xff]
        %v364 = vsel %vm360, 1, 0
        %v365 = vsel %vm361, 1, 0
        %vm366 = vcmp.eq.s32.totalorder %v364, 1
        %vm367 = vcmp.eq.s32.totalorder %v365, 1
        %v369 = vcombine.high %v362, %v362
        %v371 = vsel %vm366, %v362, 0.0
        %v372 = vsel %vm367, %v369, 0.0
        %v374 = vcombine.high %v363, %v363
        %v376 = vsel %vm366, %v363, 0.0
        %v377 = vsel %vm367, %v374, 0.0
        %vm378 = vcmask 1043456
        %v379 = vsel %vm378, %v371, -inf
        %v380 = vrot.slane %v379, 4
        %v381 = vmax.f32 %v379, %v380
        %v382 = vrot.slane %v381, 2
        %v383 = vmax.f32 %v381, %v382
        %v384 = vrot.slane %v383, 1
        %v385 = vmax.f32 %v383, %v384
        %v386 = vsel %vm378, %v372, -inf
        %v387 = vrot.slane %v386, 4
        %v388 = vmax.f32 %v386, %v387
        %v389 = vrot.slane %v388, 2
        %v390 = vmax.f32 %v388, %v389
        %v391 = vrot.slane %v390, 1
        %v392 = vmax.f32 %v390, %v391
        %v393 = vsub.f32 %v371, %v385
        %v394 = vsub.f32 %v372, %v392
        %v395 = vmul.f32 %v393, 1.442695
        %v396 = vpow.pop %v395
        %v397 = vmul.f32 %v394, 1.442695
        %v398 = vpow.pop %v397
        %v399 = vsel %vm378, %v396, 0.0
        %v400 = vrot.slane %v399, 4
        %v401 = vadd.f32 %v399, %v400
        %v402 = vrot.slane %v401, 2
        %v403 = vadd.f32 %v401, %v402
        %v404 = vrot.slane %v403, 1
        %v405 = vadd.f32 %v403, %v404
        %v406 = vsel %vm378, %v398, 0.0
        %v407 = vrot.slane %v406, 4
        %v408 = vadd.f32 %v406, %v407
        %v409 = vrot.slane %v408, 2
        %v410 = vadd.f32 %v408, %v409
        %v411 = vrot.slane %v410, 1
        %v412 = vadd.f32 %v410, %v411
        %v413 = vmul.f32 %v396, %v376
        %v414 = vmul.f32 %v398, %v377
        %v415 = vsel %vm378, %v413, 0.0
        %v416 = vrot.slane %v415, 4
        %v417 = vadd.f32 %v415, %v416
        %v418 = vrot.slane %v417, 2
        %v419 = vadd.f32 %v417, %v418
        %v420 = vrot.slane %v419, 1
        %v421 = vadd.f32 %v419, %v420
        %v422 = vsel %vm378, %v414, 0.0
        %v423 = vrot.slane %v422, 4
        %v424 = vadd.f32 %v422, %v423
        %v425 = vrot.slane %v424, 2
        %v426 = vadd.f32 %v424, %v425
        %v427 = vrot.slane %v426, 1
        %v428 = vadd.f32 %v426, %v427
        %v429 = vrcp.pop %v405
        %v430 = vrcp.pop %v412
        %v431 = vmul.f32 %v421, %v429
        %v432 = vmul.f32 %v428, %v430
        %vm433 = vcmask 1040384
        %v434 = vsel %vm433, %v431, 0.0
        %v435 = vsel %vm433, %v432, 0.0
        %v436 = vadd.f32 %v434, %v435
        %437 = vadd.xlane.f32.xlu0 %v436
        %v438 = vpop.xlane.xlu0 %437
        %v439 = vrot.slane %v438, 4
        %v440 = vadd.f32 %v438, %v439
        %v441 = vrot.slane %v440, 2
        %v442 = vadd.f32 %v440, %v441
        %v443 = vrot.slane %v442, 1
        %v444 = vadd.f32 %v442, %v443
        %s445 = vtos %v444
        %v446 = vstv %s445
        %v447 = vsel %vm378, %v376, 0.0
        %v448 = vsel %vm378, %v377, 0.0
        %v449 = vadd.f32 %v447, %v448
        %450 = vadd.xlane.f32.xlu0 %v449
        %v451 = vpop.xlane.xlu0 %450
        %v452 = vrot.slane %v451, 4
        %v453 = vadd.f32 %v451, %v452
        %v454 = vrot.slane %v453, 2
        %v455 = vadd.f32 %v453, %v454
        %v456 = vrot.slane %v455, 1
        %v457 = vadd.f32 %v455, %v456
        %s458 = vtos %v457
        %v459 = vstv %s458
        %s460 = ssub.s32 256, %s353
        %p461 = scmp.gt.s32.totalorder %s460, 0
        %s462 = scalar_select %p461, %s460, 0
        %p463 = scmp.lt.s32.totalorder %s462, 256
        %s464 = scalar_select %p463, %s462, 256
        %s465 = scvt.s32.f32 %s464
        %v466 = vld [vmem:[%s331] sm:$0x1]
        %v467 = vadd.f32 %v466, %v446
        %vm468 = vcmask 0
        %469 = vst.msk [vmem:[%s331] sm:$0x1] %vm468, %v467
        %v470 = vld [vmem:[%s337] sm:$0x1]
        %v471 = vsub.f32 %v459, %v446
        %v472 = vadd.f32 %v470, %v471
        %473 = vst.msk [vmem:[%s337] sm:$0x1] %vm468, %v472
        %v474 = vld [vmem:[%s343] sm:$0x1]
        %v475 = vstv %s465
        %v476 = vsub.f32 %v475, %v446
        %v477 = vadd.f32 %v474, %v476
        %478 = vst.msk [vmem:[%s343] sm:$0x1] %vm468, %v477
        %p479 = scmp.lt.s32.totalorder %s27, 1
        %s480 = scalar_select %p479, %s27, 1
        %p481 = scmp.lt.s32.totalorder %s28, 0
        %s482 = scalar_select %p481, %s28, 0
        %s483 = sadd.s32 %s482, %s480
        %s484 = scalar_lea.vmem %s2, %s483
        %p485 = scmp.lt.s32.totalorder %s27, 1
        %s486 = scalar_select %p485, %s27, 1
        %p487 = scmp.lt.s32.totalorder %s28, 0
        %s488 = scalar_select %p487, %s28, 0
        %s489 = sadd.s32 %s488, %s486
        %s490 = scalar_lea.vmem %s3, %s489
        %p491 = scmp.lt.s32.totalorder %s27, 1
        %s492 = scalar_select %p491, %s27, 1
        %p493 = scmp.lt.s32.totalorder %s28, 0
        %s494 = scalar_select %p493, %s28, 0
        %s495 = sadd.s32 %s494, %s492
        %s496 = scalar_lea.vmem %s4, %s495
        // Predicated region
        $region41: #{tpu_custom_call.1} parent=27 // pred_check
          %p497 = pneg %p129
        $region42: #{tpu_custom_call.1} parent=27 // pred_check_branch
          %499 = sbr.rel (%p497) target = $region44
        $region43: #{tpu_custom_call.1} parent=27 // pred_region
          _
        $region44: #{tpu_custom_call.1} parent=27 // pred_fallthru
          _
        // Predicated region
        $region45: #{tpu_custom_call.1} parent=27 // pred_check
          %p500 = pneg %p157
        $region46: #{tpu_custom_call.1} parent=27 // pred_check_branch
          %502 = sbr.rel (%p500) target = $region48
        $region47: #{tpu_custom_call.1} parent=27 // pred_region
          _
        $region48: #{tpu_custom_call.1} parent=27 // pred_fallthru
          _
        // Predicated region
        $region49: #{tpu_custom_call.1} parent=27 // pred_check
          %p503 = pneg %p185
        $region50: #{tpu_custom_call.1} parent=27 // pred_check_branch
          %505 = sbr.rel (%p503) target = $region52
        $region51: #{tpu_custom_call.1} parent=27 // pred_region
          _
        $region52: #{tpu_custom_call.1} parent=27 // pred_fallthru
          _
      $region28: #{tpu_custom_call.1} parent=5 // pred_fallthru
        _
      %p506 = scmp.le.s32.totalorder 2, %s17
      // Predicated region
      $region53: #{tpu_custom_call.1} parent=5 // pred_check
        %p507 = pneg %p506
      $region54: #{tpu_custom_call.1} parent=5 // pred_check_branch
        %509 = sbr.rel (%p507) target = $region56
      $region55: #{tpu_custom_call.1} parent=5 // pred_region
        %s510 = ssub.s32 %s17, 2
        // Predicated region
        $region57: #{tpu_custom_call.1} parent=55 // pred_check
          %p511 = pneg %p135
        $region58: #{tpu_custom_call.1} parent=55 // pred_check_branch
          %513 = sbr.rel (%p511) target = $region60
        $region59: #{tpu_custom_call.1} parent=55 // pred_region
          %p514 = scmp.lt.s32.totalorder %s30, 1
          %s515 = scalar_select %p514, %s30, 1
          %p516 = scmp.lt.s32.totalorder %s31, 0
          %s517 = scalar_select %p516, %s31, 0
          %s518 = sadd.s32 %s517, %s515
          %s519 = scalar_lea.vmem %s2, %s518
        $region60: #{tpu_custom_call.1} parent=55 // pred_fallthru
          _
        // Predicated region
        $region61: #{tpu_custom_call.1} parent=55 // pred_check
          %p520 = pneg %p163
        $region62: #{tpu_custom_call.1} parent=55 // pred_check_branch
          %522 = sbr.rel (%p520) target = $region64
        $region63: #{tpu_custom_call.1} parent=55 // pred_region
          %p523 = scmp.lt.s32.totalorder %s30, 1
          %s524 = scalar_select %p523, %s30, 1
          %p525 = scmp.lt.s32.totalorder %s31, 0
          %s526 = scalar_select %p525, %s31, 0
          %s527 = sadd.s32 %s526, %s524
          %s528 = scalar_lea.vmem %s3, %s527
        $region64: #{tpu_custom_call.1} parent=55 // pred_fallthru
          _
        // Predicated region
        $region65: #{tpu_custom_call.1} parent=55 // pred_check
          %p529 = pneg %p191
        $region66: #{tpu_custom_call.1} parent=55 // pred_check_branch
          %531 = sbr.rel (%p529) target = $region68
        $region67: #{tpu_custom_call.1} parent=55 // pred_region
          %p532 = scmp.lt.s32.totalorder %s30, 1
          %s533 = scalar_select %p532, %s30, 1
          %p534 = scmp.lt.s32.totalorder %s31, 0
          %s535 = scalar_select %p534, %s31, 0
          %s536 = sadd.s32 %s535, %s533
          %s537 = scalar_lea.vmem %s4, %s536
        $region68: #{tpu_custom_call.1} parent=55 // pred_fallthru
          _
      $region56: #{tpu_custom_call.1} parent=5 // pred_fallthru
        _
    $region6: #{tpu_custom_call.1} parent=1 // loop_footer
      %s21 = sadd.s32 1, %s17
    $region7: #{tpu_custom_call.1} parent=1 // loop_footer_branch
      %16 = sbr.rel target = $region3
    $region8: #{tpu_custom_call.1} parent=1 // loop_exit
      _
    %538 = vsyncpa [#allocation3], 1
    %s539 = scalar_lea.sflag [#allocation3], 1
    %540 = vsyncpa %s539, 1
    %541 = vsyncpa [#allocation5], 1
    %s542 = scalar_lea.sflag [#allocation5], 1
    %543 = vsyncpa %s542, 1

</llo_original>
